<compile_context>
chip_gen: v5e
topology: v5e:2x2
jax: 0.10.0
libtpu: 0.0.40
codegen_flags: <defaults>
</compile_context>

<pallas_src>
import jax
import jax.numpy as jnp
from jax.experimental import pallas as pl
from jax.experimental.pallas import tpu as pltpu


_ONES_K = 8  # lane width of the all-ones pooling operand fed to the MXU


def _cdiv(a, b):
    return -(-a // b)


def _round_up(x, m):
    return ((x + m - 1) // m) * m


def _sublane_multiple(dtype):
    # Sub-32-bit dtypes pack along sublanes: 8 rows for 4B, 16 for 2B, 32 for 1B.
    return max(8, 32 // max(jnp.dtype(dtype).itemsize, 1))


def _padded_2d_bytes(rows, cols, dtype):
    """VMEM bytes of a (rows, cols) tile after (sublane, lane) padding."""
    it = jnp.dtype(dtype).itemsize
    return (_round_up(max(rows, 1), _sublane_multiple(dtype))
            * _round_up(max(cols, 1), 128) * it)


def _vmem_capacity_bytes(default=64 * 1024 * 1024):
    """Per-core VMEM capacity; conservative (v7x-sized) fallback if unavailable."""
    try:
        cap = getattr(pltpu.get_tpu_info(), "vmem_capacity_bytes", None)
        if cap:
            return int(cap)
    except Exception:
        pass
    return default


def _fast_rcnn_predictor_kernel(x_ref, ones_ref, wt_ref, b_ref, o_ref):
    # x_ref   : (tile_n, C, HW)   activations, native dtype (streamed)
    # ones_ref: (HW, K)           all-ones in x dtype (resident pooling operand)
    # wt_ref  : (C, NC_pad)       f32 Linear weight^T, pre-scaled by 1/HW (resident)
    # b_ref   : (1, NC_pad)       f32 bias, zero-padded columns (resident)
    # o_ref   : (tile_n, NC_pad)  logits
    tile_n, c, hw = x_ref.shape
    k = ones_ref.shape[1]

    # Average-pool over HW on the MXU: batched contraction against all-ones
    # ('nch,nhk->nck' is the canonical flash-attention "PV" pattern), f32 acc.
    # The XLU stays off the hot path; the only cross-layout work left is the
    # small (tile_n, C) pooled tensor, ~HW x less data than the x tile.
    ones_b = jnp.broadcast_to(ones_ref[...], (tile_n, hw, k))
    pooled3 = jnp.einsum("nch,nhk->nck", x_ref[...], ones_b,
                         preferred_element_type=jnp.float32)       # (tile_n, C, K)
    pooled = pooled3[:, :, 0]                                      # (tile_n, C) f32

    # Projection on the MXU (1/HW already folded into wt); bias broadcast over rows.
    logits = jnp.dot(pooled, wt_ref[...], preferred_element_type=jnp.float32)
    o_ref[...] = (logits + b_ref[...]).astype(o_ref.dtype)


def fast_rcnn_predictor(x, weight, bias):
    """x: (N, C, H, W); weight: (num_classes, C); bias: (num_classes,) -> (N, num_classes)."""
    N, C, H, W = x.shape
    num_classes = weight.shape[0]
    HW = H * W
    x_dtype = x.dtype
    x_item = jnp.dtype(x_dtype).itemsize

    # ---- wrapper-side parameter prep (tiny, one-off) -------------------------
    nc_pad = _round_up(max(num_classes, 1), 128)                 # lane-dense output
    w_t = weight.T.astype(jnp.float32) / float(HW)               # fold pooling scale
    w_t = jnp.pad(w_t, ((0, 0), (0, nc_pad - num_classes)))      # (C, NC_pad)
    b2d = jnp.pad(bias.astype(jnp.float32).reshape(1, num_classes),
                  ((0, 0), (0, nc_pad - num_classes)))           # (1, NC_pad)
    ones_op = jnp.ones((HW, _ONES_K), dtype=x_dtype)             # MXU pooling operand

    # Native-dtype stream: no f32 upcast (halves HBM traffic for bf16 models).
    x_flat = x.reshape(N, C, HW)

    # ---- tile sizing from PADDED VMEM footprints ------------------------------
    cap = _vmem_capacity_bytes()
    budget = int(0.75 * cap)     # ~96 MiB on v5e/v6e (128 MiB), ~48 MiB on v7x (64 MiB/TC)

    # Resident operands: budget 2 buffers for every BlockSpec, even constant ones.
    fixed = (2 * _padded_2d_bytes(C, nc_pad, jnp.float32)        # weight
             + 2 * _padded_2d_bytes(1, nc_pad, jnp.float32)      # bias
             + 2 * _padded_2d_bytes(HW, _ONES_K, x_dtype))       # ones

    # Per-ROI-row footprint: double-buffered x block, pooling intermediates, output.
    per_row = (2 * _padded_2d_bytes(C, HW, x_dtype)              # x (2 buffers, lane-padded HW)
               + _padded_2d_bytes(C, _ONES_K, jnp.float32)       # pooled3 (f32, lane-padded)
               + _padded_2d_bytes(HW, _ONES_K, x_dtype)          # broadcast ones
               + _round_up(C, 128) * 4                           # pooled (C on lanes, f32)
               + 2 * nc_pad * x_item)                            # out (2 buffers)
    per_row = int(per_row * 1.1)                                 # safety margin

    align = _sublane_multiple(x_dtype)                           # 8 f32 / 16 bf16 / 32 int8
    tile_budget = max(1, int((budget - fixed) // per_row))
    if tile_budget >= align:
        tile_budget = (tile_budget // align) * align
        n_steps = _cdiv(N, tile_budget)
        tile_n = min(_round_up(_cdiv(N, n_steps), align), tile_budget)
    else:
        tile_n = max(1, min(tile_budget, N))

    n_pad = _round_up(N, tile_n)
    if n_pad != N:
        x_flat = jnp.pad(x_flat, ((0, n_pad - N), (0, 0), (0, 0)))
    grid = (n_pad // tile_n,)

    # Advisory cost estimate so XLA schedules around this bandwidth-heavy call.
    cost = pl.CostEstimate(
        flops=2 * n_pad * C * (HW * _ONES_K + nc_pad),
        transcendentals=0,
        bytes_accessed=(n_pad * C * HW * x_item
                        + C * nc_pad * 4 + nc_pad * 4
                        + HW * _ONES_K * x_item
                        + n_pad * nc_pad * x_item),
    )

    out = pl.pallas_call(
        _fast_rcnn_predictor_kernel,
        out_shape=jax.ShapeDtypeStruct((n_pad, nc_pad), x_dtype),
        grid=grid,
        in_specs=[
            pl.BlockSpec((tile_n, C, HW), lambda i: (i, 0, 0)),   # streamed, double-buffered
            pl.BlockSpec((HW, _ONES_K), lambda i: (0, 0)),        # VMEM-resident ones
            pl.BlockSpec((C, nc_pad), lambda i: (0, 0)),          # VMEM-resident weight
            pl.BlockSpec((1, nc_pad), lambda i: (0, 0)),          # VMEM-resident bias
        ],
        out_specs=pl.BlockSpec((tile_n, nc_pad), lambda i: (i, 0)),
        compiler_params=pltpu.CompilerParams(
            dimension_semantics=("parallel",),   # independent N tiles -> megacore shard
            vmem_limit_bytes=budget,
        ),
        cost_estimate=cost,
    )(x_flat, ones_op, w_t, b2d)

    return out[:N, :num_classes]


if __name__ == "__main__":
    key = jax.random.PRNGKey(0)
    k_x, k_w = jax.random.split(key)

    # Small shapes consistent with the module: N=2 ROIs, in_channels=4,
    # 16x16 spatial, num_classes=8.
    N, C, H, W = 2, 4, 16, 16
    num_classes = 8

    x = jax.random.normal(k_x, (N, C, H, W), dtype=jnp.float32)

    # Deterministic params matching nn.init.normal_(std=0.01) / zero bias.
    weight = 0.01 * jax.random.normal(k_w, (num_classes, C), dtype=jnp.float32)
    bias = jnp.zeros((num_classes,), dtype=jnp.float32)

    cls_logit = jax.block_until_ready(fast_rcnn_predictor(x, weight, bias))

    # Pure-JAX reference (high-precision matmul so the reference itself is f32-accurate).
    pooled_ref = jnp.mean(x, axis=(2, 3))                                   # (N, C)
    ref = jnp.dot(pooled_ref, weight.T,
                  precision=jax.lax.Precision.HIGHEST) + bias               # (N, num_classes)
    assert cls_logit.shape == (N, num_classes)
    assert jnp.allclose(cls_logit, ref, atol=1e-5, rtol=1e-5), (
        float(jnp.max(jnp.abs(cls_logit - ref))))

    print("KERNEL_OK")
</pallas_src>

<mosaic_0001>
module attributes {stable_mosaic.version = 11 : i64} {
  func.func @_fast_rcnn_predictor_kernel(%arg0: i32, %arg1: memref<8x4x256xf32, #tpu.memory_space<vmem>>, %arg2: memref<256x8xf32, #tpu.memory_space<vmem>>, %arg3: memref<4x128xf32, #tpu.memory_space<vmem>>, %arg4: memref<1x128xf32, #tpu.memory_space<vmem>>, %arg5: memref<8x128xf32, #tpu.memory_space<vmem>>) attributes {dimension_semantics = [#tpu.dimension_semantics<parallel>], iteration_bounds = array<i64: 1>, scalar_prefetch = 0 : i64, scratch_operands = 0 : i64, tpu.core_type = #tpu.core_type<tc>, window_params = [{transform_indices = @transform_0, window_bounds = array<i64: 8, 4, 256>}, {pipeline_mode = #tpu.pipeline_mode<synchronous>, transform_indices = @transform_1, window_bounds = array<i64: 256, 8>}, {pipeline_mode = #tpu.pipeline_mode<synchronous>, transform_indices = @transform_2, window_bounds = array<i64: 4, 128>}, {pipeline_mode = #tpu.pipeline_mode<synchronous>, transform_indices = @transform_3, window_bounds = array<i64: 1, 128>}, {transform_indices = @transform_4, window_bounds = array<i64: 8, 128>}]} {
    %c0 = arith.constant 0 : index
    %c0_0 = arith.constant 0 : index
    %0 = vector.load %arg2[%c0, %c0_0] : memref<256x8xf32, #tpu.memory_space<vmem>>, vector<256x8xf32>
    %1 = vector.shape_cast %0 : vector<256x8xf32> to vector<1x256x8xf32>
    %2 = vector.broadcast %1 : vector<1x256x8xf32> to vector<8x256x8xf32>
    %c0_1 = arith.constant 0 : index
    %c0_2 = arith.constant 0 : index
    %c0_3 = arith.constant 0 : index
    %3 = vector.load %arg1[%c0_1, %c0_2, %c0_3] : memref<8x4x256xf32, #tpu.memory_space<vmem>>, vector<8x4x256xf32>
    "tpu.trace_start"() <{level = 10 : i32, message = "nch,nhk->nck"}> : () -> ()
    %cst = arith.constant dense<0.000000e+00> : vector<8x4x8xf32>
    %4 = tpu.matmul %3, %2, %cst {dimension_numbers = #tpu.dot_dimension_numbers<[2], [1], [1], [2], [0, 0, 0, 1, 1, 2], [0], [0]>} : vector<8x4x256xf32>, vector<8x256x8xf32>, vector<8x4x8xf32> -> vector<8x4x8xf32>
    "tpu.trace_stop"() : () -> ()
    %5 = vector.extract_strided_slice %4 {offsets = [0, 0, 0], sizes = [8, 4, 1], strides = [1, 1, 1]} : vector<8x4x8xf32> to vector<8x4x1xf32>
    %6 = vector.shape_cast %5 : vector<8x4x1xf32> to vector<8x4xf32>
    %c0_4 = arith.constant 0 : index
    %c0_5 = arith.constant 0 : index
    %7 = vector.load %arg3[%c0_4, %c0_5] : memref<4x128xf32, #tpu.memory_space<vmem>>, vector<4x128xf32>
    %cst_6 = arith.constant dense<0.000000e+00> : vector<8x128xf32>
    %8 = tpu.matmul %6, %7, %cst_6 {dimension_numbers = #tpu.dot_dimension_numbers<[1], [0], [0], [1], [0, 0, 1, 1], [], []>} : vector<8x4xf32>, vector<4x128xf32>, vector<8x128xf32> -> vector<8x128xf32>
    %c0_7 = arith.constant 0 : index
    %c0_8 = arith.constant 0 : index
    %9 = vector.load %arg4[%c0_7, %c0_8] : memref<1x128xf32, #tpu.memory_space<vmem>>, vector<1x128xf32>
    %10 = vector.broadcast %9 : vector<1x128xf32> to vector<8x128xf32>
    %11 = arith.addf %8, %10 : vector<8x128xf32>
    %c0_9 = arith.constant 0 : index
    %c0_10 = arith.constant 0 : index
    %12 = vector.load %arg5[%c0_9, %c0_10] : memref<8x128xf32, #tpu.memory_space<vmem>>, vector<8x128xf32>
    tpu.vector_store %arg5[%c0_9, %c0_10], %11 {strides = array<i32>} : memref<8x128xf32, #tpu.memory_space<vmem>>, vector<8x128xf32>,
    return
  }
  func.func @transform_0(%arg0: i32) -> (i32, i32, i32) {
    %c0_i32 = arith.constant 0 : i32
    %c0_i32_0 = arith.constant 0 : i32
    %c0_i32_1 = arith.constant 0 : i32
    return %arg0, %c0_i32, %c0_i32_0 : i32, i32, i32
  }
  func.func @transform_1(%arg0: i32) -> (i32, i32) {
    %c0_i32 = arith.constant 0 : i32
    %c0_i32_0 = arith.constant 0 : i32
    %c0_i32_1 = arith.constant 0 : i32
    return %c0_i32, %c0_i32_0 : i32, i32
  }
  func.func @transform_2(%arg0: i32) -> (i32, i32) {
    %c0_i32 = arith.constant 0 : i32
    %c0_i32_0 = arith.constant 0 : i32
    %c0_i32_1 = arith.constant 0 : i32
    return %c0_i32, %c0_i32_0 : i32, i32
  }
  func.func @transform_3(%arg0: i32) -> (i32, i32) {
    %c0_i32 = arith.constant 0 : i32
    %c0_i32_0 = arith.constant 0 : i32
    %c0_i32_1 = arith.constant 0 : i32
    return %c0_i32, %c0_i32_0 : i32, i32
  }
  func.func @transform_4(%arg0: i32) -> (i32, i32) {
    %c0_i32 = arith.constant 0 : i32
    %c0_i32_0 = arith.constant 0 : i32
    return %arg0, %c0_i32 : i32, i32
  }
}

</mosaic_0001>

<llo_original>
// kernel: tpu_custom_call.1
$region0: #{tpu_custom_call.1}
  #allocation0 [shape = 'u32[]', space=smem, size = 0x4, offset = 0x4, fixed_abs, tag = 'smem constant byte address 0x4 - core index']
  #allocation1 [shape = 'u32[72,128]{1,0:T(1,128)}', space=vmem, size = 0x9000, scoped, tag = 'internal scratch']
  %s0 = inlined_call_operand.vmem [shape: f32[8,4,256], index: 0, kind: input, shape index: {}]
  %s1 = inlined_call_operand.vmem [shape: f32[256,8], index: 1, kind: input, shape index: {}]
  %s2 = inlined_call_operand.vmem [shape: f32[4,128], index: 2, kind: input, shape index: {}]
  %s3 = inlined_call_operand.vmem [shape: f32[1,128], index: 3, kind: input, shape index: {}]
  %s4 = inlined_call_operand.hbm [shape: f32[8,128], index: 4, kind: output, shape index: {}]
  %s5 = sld [smem:[#allocation0]]
  $region26: #{tpu_custom_call.1} parent=0
    _
  %s7 = ssub.s32 1, %s5
  %s8 = scalar_select 0, %s7, %s5
  $region1: #{tpu_custom_call.1} parent=0
    #allocation2 [shape = 'u8[4096]{0}', space=vmem, size = 0x1000, scoped, tag = 'output window, operand 0, single buffered']
    #allocation3 [shape = 's32[1]{0}', space=sflag, size = 0x4, scoped, tag = 'scoped memory for tpu_custom_call.1']
    %9 = vsyncpa [#allocation3], 0
    // Predicated region
    $region2: #{tpu_custom_call.1} parent=1 // pred_check
      _
    $region3: #{tpu_custom_call.1} parent=1 // pred_check_branch
      %11 = sbr.rel (0) target = $region5
    $region4: #{tpu_custom_call.1} parent=1 // pred_region
      _
    $region5: #{tpu_custom_call.1} parent=1 // pred_fallthru
      _
    // Predicated region
    $region6: #{tpu_custom_call.1} parent=1 // pred_check
      _
    $region7: #{tpu_custom_call.1} parent=1 // pred_check_branch
      %13 = sbr.rel (0) target = $region9
    $region8: #{tpu_custom_call.1} parent=1 // pred_region
      _
    $region9: #{tpu_custom_call.1} parent=1 // pred_fallthru
      _
    // Predicated region
    $region10: #{tpu_custom_call.1} parent=1 // pred_check
      _
    $region11: #{tpu_custom_call.1} parent=1 // pred_check_branch
      %15 = sbr.rel (0) target = $region13
    $region12: #{tpu_custom_call.1} parent=1 // pred_region
      _
    $region13: #{tpu_custom_call.1} parent=1 // pred_fallthru
      _
    // Predicated region
    $region14: #{tpu_custom_call.1} parent=1 // pred_check
      _
    $region15: #{tpu_custom_call.1} parent=1 // pred_check_branch
      %17 = sbr.rel (0) target = $region17
    $region16: #{tpu_custom_call.1} parent=1 // pred_region
      _
    $region17: #{tpu_custom_call.1} parent=1 // pred_fallthru
      _
    %v18 = vld [vmem:[%s1] sm:$0xff]
    %v19 = vld [vmem:[%s1 + $0x8] sm:$0xff]
    %v20 = vld [vmem:[%s1 + $0x10] sm:$0xff]
    %v21 = vld [vmem:[%s1 + $0x18] sm:$0xff]
    %v22 = vld [vmem:[%s1 + $0x20] sm:$0xff]
    %v23 = vld [vmem:[%s1 + $0x28] sm:$0xff]
    %v24 = vld [vmem:[%s1 + $0x30] sm:$0xff]
    %v25 = vld [vmem:[%s1 + $0x38] sm:$0xff]
    %v26 = vld [vmem:[%s1 + $0x40] sm:$0xff]
    %v27 = vld [vmem:[%s1 + $0x48] sm:$0xff]
    %v28 = vld [vmem:[%s1 + $0x50] sm:$0xff]
    %v29 = vld [vmem:[%s1 + $0x58] sm:$0xff]
    %v30 = vld [vmem:[%s1 + $0x60] sm:$0xff]
    %v31 = vld [vmem:[%s1 + $0x68] sm:$0xff]
    %v32 = vld [vmem:[%s1 + $0x70] sm:$0xff]
    %v33 = vld [vmem:[%s1 + $0x78] sm:$0xff]
    %v34 = vld [vmem:[%s1 + $0x80] sm:$0xff]
    %v35 = vld [vmem:[%s1 + $0x88] sm:$0xff]
    %v36 = vld [vmem:[%s1 + $0x90] sm:$0xff]
    %v37 = vld [vmem:[%s1 + $0x98] sm:$0xff]
    %v38 = vld [vmem:[%s1 + $0xa0] sm:$0xff]
    %v39 = vld [vmem:[%s1 + $0xa8] sm:$0xff]
    %v40 = vld [vmem:[%s1 + $0xb0] sm:$0xff]
    %v41 = vld [vmem:[%s1 + $0xb8] sm:$0xff]
    %v42 = vld [vmem:[%s1 + $0xc0] sm:$0xff]
    %v43 = vld [vmem:[%s1 + $0xc8] sm:$0xff]
    %v44 = vld [vmem:[%s1 + $0xd0] sm:$0xff]
    %v45 = vld [vmem:[%s1 + $0xd8] sm:$0xff]
    %v46 = vld [vmem:[%s1 + $0xe0] sm:$0xff]
    %v47 = vld [vmem:[%s1 + $0xe8] sm:$0xff]
    %v48 = vld [vmem:[%s1 + $0xf0] sm:$0xff]
    %v49 = vld [vmem:[%s1 + $0xf8] sm:$0xff]
    %v50 = vld [vmem:[%s0] sm:$0xff]
    %v51 = vld [vmem:[%s0 + $0x8] sm:$0xff]
    %v52 = vld [vmem:[%s0 + $0x10] sm:$0xff]
    %v53 = vld [vmem:[%s0 + $0x18] sm:$0xff]
    %v54 = vld [vmem:[%s0 + $0x20] sm:$0xff]
    %v55 = vld [vmem:[%s0 + $0x28] sm:$0xff]
    %v56 = vld [vmem:[%s0 + $0x30] sm:$0xff]
    %v57 = vld [vmem:[%s0 + $0x38] sm:$0xff]
    %59 = vst [vmem:[#allocation1] ss:$2 sm:$0xff] %v50
    %v60 = vld.sshfl [vmem:[#allocation1] sm:$0xff pattern:$0x75316420]
    %v61 = vld.sshfl [vmem:[#allocation1 + $0x8] sm:$0xff pattern:$0x75316420]
    %64 = vmatpush.msra.mxu0 %v33
    %65 = vmatpush.msra.mxu0 %v32
    %66 = vmatpush.msra.mxu0 %v31
    %67 = vmatpush.msra.mxu0 %v30
    %68 = vmatpush.msra.mxu0 %v29
    %69 = vmatpush.msra.mxu0 %v28
    %70 = vmatpush.msra.mxu0 %v27
    %71 = vmatpush.msra.mxu0 %v26
    %72 = vmatpush.msra.mxu0 %v25
    %73 = vmatpush.msra.mxu0 %v24
    %74 = vmatpush.msra.mxu0 %v23
    %75 = vmatpush.msra.mxu0 %v22
    %76 = vmatpush.msra.mxu0 %v21
    %77 = vmatpush.msra.mxu0 %v20
    %78 = vmatpush.msra.mxu0 %v19
    %79 = vmatpush.msra.mxu0 %v18
    %80 = vmatmul.f32.gmra.mxu0 %v60
    %v81 = vpop.f32.mrf.mxu0
    %v82 = vadd.f32 0.0, %v81
    %83 = vdwg.mxu0
    %84 = vmatpush.msra.mxu0 %v49
    %85 = vmatpush.msra.mxu0 %v48
    %86 = vmatpush.msra.mxu0 %v47
    %87 = vmatpush.msra.mxu0 %v46
    %88 = vmatpush.msra.mxu0 %v45
    %89 = vmatpush.msra.mxu0 %v44
    %90 = vmatpush.msra.mxu0 %v43
    %91 = vmatpush.msra.mxu0 %v42
    %92 = vmatpush.msra.mxu0 %v41
    %93 = vmatpush.msra.mxu0 %v40
    %94 = vmatpush.msra.mxu0 %v39
    %95 = vmatpush.msra.mxu0 %v38
    %96 = vmatpush.msra.mxu0 %v37
    %97 = vmatpush.msra.mxu0 %v36
    %98 = vmatpush.msra.mxu0 %v35
    %99 = vmatpush.msra.mxu0 %v34
    %100 = vmatmul.f32.gmra.mxu0 %v61
    %v101 = vpop.f32.mrf.mxu0
    %v102 = vadd.f32 %v82, %v101
    %103 = vdwg.mxu0
    %105 = vst [vmem:[#allocation1] ss:$2 sm:$0xff] %v51
    %v106 = vld.sshfl [vmem:[#allocation1] sm:$0xff pattern:$0x75316420]
    %v107 = vld.sshfl [vmem:[#allocation1 + $0x8] sm:$0xff pattern:$0x75316420]
    %110 = vmatpush.msra.mxu0 %v33
    %111 = vmatpush.msra.mxu0 %v32
    %112 = vmatpush.msra.mxu0 %v31
    %113 = vmatpush.msra.mxu0 %v30
    %114 = vmatpush.msra.mxu0 %v29
    %115 = vmatpush.msra.mxu0 %v28
    %116 = vmatpush.msra.mxu0 %v27
    %117 = vmatpush.msra.mxu0 %v26
    %118 = vmatpush.msra.mxu0 %v25
    %119 = vmatpush.msra.mxu0 %v24
    %120 = vmatpush.msra.mxu0 %v23
    %121 = vmatpush.msra.mxu0 %v22
    %122 = vmatpush.msra.mxu0 %v21
    %123 = vmatpush.msra.mxu0 %v20
    %124 = vmatpush.msra.mxu0 %v19
    %125 = vmatpush.msra.mxu0 %v18
    %126 = vmatmul.f32.gmra.mxu0 %v106
    %v127 = vpop.f32.mrf.mxu0
    %v128 = vadd.f32 0.0, %v127
    %129 = vdwg.mxu0
    %130 = vmatpush.msra.mxu0 %v49
    %131 = vmatpush.msra.mxu0 %v48
    %132 = vmatpush.msra.mxu0 %v47
    %133 = vmatpush.msra.mxu0 %v46
    %134 = vmatpush.msra.mxu0 %v45
    %135 = vmatpush.msra.mxu0 %v44
    %136 = vmatpush.msra.mxu0 %v43
    %137 = vmatpush.msra.mxu0 %v42
    %138 = vmatpush.msra.mxu0 %v41
    %139 = vmatpush.msra.mxu0 %v40
    %140 = vmatpush.msra.mxu0 %v39
    %141 = vmatpush.msra.mxu0 %v38
    %142 = vmatpush.msra.mxu0 %v37
    %143 = vmatpush.msra.mxu0 %v36
    %144 = vmatpush.msra.mxu0 %v35
    %145 = vmatpush.msra.mxu0 %v34
    %146 = vmatmul.f32.gmra.mxu0 %v107
    %v147 = vpop.f32.mrf.mxu0
    %v148 = vadd.f32 %v128, %v147
    %149 = vdwg.mxu0
    %151 = vst [vmem:[#allocation1] ss:$2 sm:$0xff] %v52
    %v152 = vld.sshfl [vmem:[#allocation1] sm:$0xff pattern:$0x75316420]
    %v153 = vld.sshfl [vmem:[#allocation1 + $0x8] sm:$0xff pattern:$0x75316420]
    %156 = vmatpush.msra.mxu0 %v33
    %157 = vmatpush.msra.mxu0 %v32
    %158 = vmatpush.msra.mxu0 %v31
    %159 = vmatpush.msra.mxu0 %v30
    %160 = vmatpush.msra.mxu0 %v29
    %161 = vmatpush.msra.mxu0 %v28
    %162 = vmatpush.msra.mxu0 %v27
    %163 = vmatpush.msra.mxu0 %v26
    %164 = vmatpush.msra.mxu0 %v25
    %165 = vmatpush.msra.mxu0 %v24
    %166 = vmatpush.msra.mxu0 %v23
    %167 = vmatpush.msra.mxu0 %v22
    %168 = vmatpush.msra.mxu0 %v21
    %169 = vmatpush.msra.mxu0 %v20
    %170 = vmatpush.msra.mxu0 %v19
    %171 = vmatpush.msra.mxu0 %v18
    %172 = vmatmul.f32.gmra.mxu0 %v152
    %v173 = vpop.f32.mrf.mxu0
    %v174 = vadd.f32 0.0, %v173
    %175 = vdwg.mxu0
    %176 = vmatpush.msra.mxu0 %v49
    %177 = vmatpush.msra.mxu0 %v48
    %178 = vmatpush.msra.mxu0 %v47
    %179 = vmatpush.msra.mxu0 %v46
    %180 = vmatpush.msra.mxu0 %v45
    %181 = vmatpush.msra.mxu0 %v44
    %182 = vmatpush.msra.mxu0 %v43
    %183 = vmatpush.msra.mxu0 %v42
    %184 = vmatpush.msra.mxu0 %v41
    %185 = vmatpush.msra.mxu0 %v40
    %186 = vmatpush.msra.mxu0 %v39
    %187 = vmatpush.msra.mxu0 %v38
    %188 = vmatpush.msra.mxu0 %v37
    %189 = vmatpush.msra.mxu0 %v36
    %190 = vmatpush.msra.mxu0 %v35
    %191 = vmatpush.msra.mxu0 %v34
    %192 = vmatmul.f32.gmra.mxu0 %v153
    %v193 = vpop.f32.mrf.mxu0
    %v194 = vadd.f32 %v174, %v193
    %195 = vdwg.mxu0
    %197 = vst [vmem:[#allocation1] ss:$2 sm:$0xff] %v53
    %v198 = vld.sshfl [vmem:[#allocation1] sm:$0xff pattern:$0x75316420]
    %v199 = vld.sshfl [vmem:[#allocation1 + $0x8] sm:$0xff pattern:$0x75316420]
    %202 = vmatpush.msra.mxu0 %v33
    %203 = vmatpush.msra.mxu0 %v32
    %204 = vmatpush.msra.mxu0 %v31
    %205 = vmatpush.msra.mxu0 %v30
    %206 = vmatpush.msra.mxu0 %v29
    %207 = vmatpush.msra.mxu0 %v28
    %208 = vmatpush.msra.mxu0 %v27
    %209 = vmatpush.msra.mxu0 %v26
    %210 = vmatpush.msra.mxu0 %v25
    %211 = vmatpush.msra.mxu0 %v24
    %212 = vmatpush.msra.mxu0 %v23
    %213 = vmatpush.msra.mxu0 %v22
    %214 = vmatpush.msra.mxu0 %v21
    %215 = vmatpush.msra.mxu0 %v20
    %216 = vmatpush.msra.mxu0 %v19
    %217 = vmatpush.msra.mxu0 %v18
    %218 = vmatmul.f32.gmra.mxu0 %v198
    %v219 = vpop.f32.mrf.mxu0
    %v220 = vadd.f32 0.0, %v219
    %221 = vdwg.mxu0
    %222 = vmatpush.msra.mxu0 %v49
    %223 = vmatpush.msra.mxu0 %v48
    %224 = vmatpush.msra.mxu0 %v47
    %225 = vmatpush.msra.mxu0 %v46
    %226 = vmatpush.msra.mxu0 %v45
    %227 = vmatpush.msra.mxu0 %v44
    %228 = vmatpush.msra.mxu0 %v43
    %229 = vmatpush.msra.mxu0 %v42
    %230 = vmatpush.msra.mxu0 %v41
    %231 = vmatpush.msra.mxu0 %v40
    %232 = vmatpush.msra.mxu0 %v39
    %233 = vmatpush.msra.mxu0 %v38
    %234 = vmatpush.msra.mxu0 %v37
    %235 = vmatpush.msra.mxu0 %v36
    %236 = vmatpush.msra.mxu0 %v35
    %237 = vmatpush.msra.mxu0 %v34
    %238 = vmatmul.f32.gmra.mxu0 %v199
    %v239 = vpop.f32.mrf.mxu0
    %v240 = vadd.f32 %v220, %v239
    %241 = vdwg.mxu0
    %243 = vst [vmem:[#allocation1] ss:$2 sm:$0xff] %v54
    %v244 = vld.sshfl [vmem:[#allocation1] sm:$0xff pattern:$0x75316420]
    %v245 = vld.sshfl [vmem:[#allocation1 + $0x8] sm:$0xff pattern:$0x75316420]
    %248 = vmatpush.msra.mxu0 %v33
    %249 = vmatpush.msra.mxu0 %v32
    %250 = vmatpush.msra.mxu0 %v31
    %251 = vmatpush.msra.mxu0 %v30
    %252 = vmatpush.msra.mxu0 %v29
    %253 = vmatpush.msra.mxu0 %v28
    %254 = vmatpush.msra.mxu0 %v27
    %255 = vmatpush.msra.mxu0 %v26
    %256 = vmatpush.msra.mxu0 %v25
    %257 = vmatpush.msra.mxu0 %v24
    %258 = vmatpush.msra.mxu0 %v23
    %259 = vmatpush.msra.mxu0 %v22
    %260 = vmatpush.msra.mxu0 %v21
    %261 = vmatpush.msra.mxu0 %v20
    %262 = vmatpush.msra.mxu0 %v19
    %263 = vmatpush.msra.mxu0 %v18
    %264 = vmatmul.f32.gmra.mxu0 %v244
    %v265 = vpop.f32.mrf.mxu0
    %v266 = vadd.f32 0.0, %v265
    %267 = vdwg.mxu0
    %268 = vmatpush.msra.mxu0 %v49
    %269 = vmatpush.msra.mxu0 %v48
    %270 = vmatpush.msra.mxu0 %v47
    %271 = vmatpush.msra.mxu0 %v46
    %272 = vmatpush.msra.mxu0 %v45
    %273 = vmatpush.msra.mxu0 %v44
    %274 = vmatpush.msra.mxu0 %v43
    %275 = vmatpush.msra.mxu0 %v42
    %276 = vmatpush.msra.mxu0 %v41
    %277 = vmatpush.msra.mxu0 %v40
    %278 = vmatpush.msra.mxu0 %v39
    %279 = vmatpush.msra.mxu0 %v38
    %280 = vmatpush.msra.mxu0 %v37
    %281 = vmatpush.msra.mxu0 %v36
    %282 = vmatpush.msra.mxu0 %v35
    %283 = vmatpush.msra.mxu0 %v34
    %284 = vmatmul.f32.gmra.mxu0 %v245
    %v285 = vpop.f32.mrf.mxu0
    %v286 = vadd.f32 %v266, %v285
    %287 = vdwg.mxu0
    %289 = vst [vmem:[#allocation1] ss:$2 sm:$0xff] %v55
    %v290 = vld.sshfl [vmem:[#allocation1] sm:$0xff pattern:$0x75316420]
    %v291 = vld.sshfl [vmem:[#allocation1 + $0x8] sm:$0xff pattern:$0x75316420]
    %294 = vmatpush.msra.mxu0 %v33
    %295 = vmatpush.msra.mxu0 %v32
    %296 = vmatpush.msra.mxu0 %v31
    %297 = vmatpush.msra.mxu0 %v30
    %298 = vmatpush.msra.mxu0 %v29
    %299 = vmatpush.msra.mxu0 %v28
    %300 = vmatpush.msra.mxu0 %v27
    %301 = vmatpush.msra.mxu0 %v26
    %302 = vmatpush.msra.mxu0 %v25
    %303 = vmatpush.msra.mxu0 %v24
    %304 = vmatpush.msra.mxu0 %v23
    %305 = vmatpush.msra.mxu0 %v22
    %306 = vmatpush.msra.mxu0 %v21
    %307 = vmatpush.msra.mxu0 %v20
    %308 = vmatpush.msra.mxu0 %v19
    %309 = vmatpush.msra.mxu0 %v18
    %310 = vmatmul.f32.gmra.mxu0 %v290
    %v311 = vpop.f32.mrf.mxu0
    %v312 = vadd.f32 0.0, %v311
    %313 = vdwg.mxu0
    %314 = vmatpush.msra.mxu0 %v49
    %315 = vmatpush.msra.mxu0 %v48
    %316 = vmatpush.msra.mxu0 %v47
    %317 = vmatpush.msra.mxu0 %v46
    %318 = vmatpush.msra.mxu0 %v45
    %319 = vmatpush.msra.mxu0 %v44
    %320 = vmatpush.msra.mxu0 %v43
    %321 = vmatpush.msra.mxu0 %v42
    %322 = vmatpush.msra.mxu0 %v41
    %323 = vmatpush.msra.mxu0 %v40
    %324 = vmatpush.msra.mxu0 %v39
    %325 = vmatpush.msra.mxu0 %v38
    %326 = vmatpush.msra.mxu0 %v37
    %327 = vmatpush.msra.mxu0 %v36
    %328 = vmatpush.msra.mxu0 %v35
    %329 = vmatpush.msra.mxu0 %v34
    %330 = vmatmul.f32.gmra.mxu0 %v291
    %v331 = vpop.f32.mrf.mxu0
    %v332 = vadd.f32 %v312, %v331
    %333 = vdwg.mxu0
    %335 = vst [vmem:[#allocation1] ss:$2 sm:$0xff] %v56
    %v336 = vld.sshfl [vmem:[#allocation1] sm:$0xff pattern:$0x75316420]
    %v337 = vld.sshfl [vmem:[#allocation1 + $0x8] sm:$0xff pattern:$0x75316420]
    %340 = vmatpush.msra.mxu0 %v33
    %341 = vmatpush.msra.mxu0 %v32
    %342 = vmatpush.msra.mxu0 %v31
    %343 = vmatpush.msra.mxu0 %v30
    %344 = vmatpush.msra.mxu0 %v29
    %345 = vmatpush.msra.mxu0 %v28
    %346 = vmatpush.msra.mxu0 %v27
    %347 = vmatpush.msra.mxu0 %v26
    %348 = vmatpush.msra.mxu0 %v25
    %349 = vmatpush.msra.mxu0 %v24
    %350 = vmatpush.msra.mxu0 %v23
    %351 = vmatpush.msra.mxu0 %v22
    %352 = vmatpush.msra.mxu0 %v21
    %353 = vmatpush.msra.mxu0 %v20
    %354 = vmatpush.msra.mxu0 %v19
    %355 = vmatpush.msra.mxu0 %v18
    %356 = vmatmul.f32.gmra.mxu0 %v336
    %v357 = vpop.f32.mrf.mxu0
    %v358 = vadd.f32 0.0, %v357
    %359 = vdwg.mxu0
    %360 = vmatpush.msra.mxu0 %v49
    %361 = vmatpush.msra.mxu0 %v48
    %362 = vmatpush.msra.mxu0 %v47
    %363 = vmatpush.msra.mxu0 %v46
    %364 = vmatpush.msra.mxu0 %v45
    %365 = vmatpush.msra.mxu0 %v44
    %366 = vmatpush.msra.mxu0 %v43
    %367 = vmatpush.msra.mxu0 %v42
    %368 = vmatpush.msra.mxu0 %v41
    %369 = vmatpush.msra.mxu0 %v40
    %370 = vmatpush.msra.mxu0 %v39
    %371 = vmatpush.msra.mxu0 %v38
    %372 = vmatpush.msra.mxu0 %v37
    %373 = vmatpush.msra.mxu0 %v36
    %374 = vmatpush.msra.mxu0 %v35
    %375 = vmatpush.msra.mxu0 %v34
    %376 = vmatmul.f32.gmra.mxu0 %v337
    %v377 = vpop.f32.mrf.mxu0
    %v378 = vadd.f32 %v358, %v377
    %379 = vdwg.mxu0
    %381 = vst [vmem:[#allocation1] ss:$2 sm:$0xff] %v57
    %v382 = vld.sshfl [vmem:[#allocation1] sm:$0xff pattern:$0x75316420]
    %v383 = vld.sshfl [vmem:[#allocation1 + $0x8] sm:$0xff pattern:$0x75316420]
    %386 = vmatpush.msra.mxu0 %v33
    %387 = vmatpush.msra.mxu0 %v32
    %388 = vmatpush.msra.mxu0 %v31
    %389 = vmatpush.msra.mxu0 %v30
    %390 = vmatpush.msra.mxu0 %v29
    %391 = vmatpush.msra.mxu0 %v28
    %392 = vmatpush.msra.mxu0 %v27
    %393 = vmatpush.msra.mxu0 %v26
    %394 = vmatpush.msra.mxu0 %v25
    %395 = vmatpush.msra.mxu0 %v24
    %396 = vmatpush.msra.mxu0 %v23
    %397 = vmatpush.msra.mxu0 %v22
    %398 = vmatpush.msra.mxu0 %v21
    %399 = vmatpush.msra.mxu0 %v20
    %400 = vmatpush.msra.mxu0 %v19
    %401 = vmatpush.msra.mxu0 %v18
    %402 = vmatmul.f32.gmra.mxu0 %v382
    %v403 = vpop.f32.mrf.mxu0
    %v404 = vadd.f32 0.0, %v403
    %405 = vdwg.mxu0
    %406 = vmatpush.msra.mxu0 %v49
    %407 = vmatpush.msra.mxu0 %v48
    %408 = vmatpush.msra.mxu0 %v47
    %409 = vmatpush.msra.mxu0 %v46
    %410 = vmatpush.msra.mxu0 %v45
    %411 = vmatpush.msra.mxu0 %v44
    %412 = vmatpush.msra.mxu0 %v43
    %413 = vmatpush.msra.mxu0 %v42
    %414 = vmatpush.msra.mxu0 %v41
    %415 = vmatpush.msra.mxu0 %v40
    %416 = vmatpush.msra.mxu0 %v39
    %417 = vmatpush.msra.mxu0 %v38
    %418 = vmatpush.msra.mxu0 %v37
    %419 = vmatpush.msra.mxu0 %v36
    %420 = vmatpush.msra.mxu0 %v35
    %421 = vmatpush.msra.mxu0 %v34
    %422 = vmatmul.f32.gmra.mxu0 %v383
    %v423 = vpop.f32.mrf.mxu0
    %v424 = vadd.f32 %v404, %v423
    %425 = vdwg.mxu0
    %v426 = vld [vmem:[%s2] sm:$0xf]
    %v427 = vld [vmem:[%s3] sm:$0x1]
    %v429 = vperm.slane %v427, 0
    %439 = vset.pattern.permute.xlu0 0
    %440 = vperm.xlu0 %439, %v102
    %v441 = vpop.permute.xlu0 %440
    %442 = vset.pattern.permute.xlu0 0
    %443 = vperm.xlu0 %442, %v148
    %v444 = vpop.permute.xlu0 %443
    %445 = vset.pattern.permute.xlu0 0
    %446 = vperm.xlu0 %445, %v194
    %v447 = vpop.permute.xlu0 %446
    %448 = vset.pattern.permute.xlu0 0
    %449 = vperm.xlu0 %448, %v240
    %v450 = vpop.permute.xlu0 %449
    %451 = vset.pattern.permute.xlu0 0
    %452 = vperm.xlu0 %451, %v286
    %v453 = vpop.permute.xlu0 %452
    %454 = vset.pattern.permute.xlu0 0
    %455 = vperm.xlu0 %454, %v332
    %v456 = vpop.permute.xlu0 %455
    %457 = vset.pattern.permute.xlu0 0
    %458 = vperm.xlu0 %457, %v378
    %v459 = vpop.permute.xlu0 %458
    %460 = vset.pattern.permute.xlu0 0
    %461 = vperm.xlu0 %460, %v424
    %v462 = vpop.permute.xlu0 %461
    %v463 = vlaneseq
    %v464 = vand.u32 %v463, 127
    %v465 = vperm.slane %v441, %v464
    %v466 = vperm.slane %v444, %v464
    %v467 = vperm.slane %v447, %v464
    %v468 = vperm.slane %v450, %v464
    %v469 = vperm.slane %v453, %v464
    %v470 = vperm.slane %v456, %v464
    %v471 = vperm.slane %v459, %v464
    %v472 = vperm.slane %v462, %v464
    %vm473 = vcmask 1041409
    %v474 = vsel %vm473, %v466, %v465
    %vm475 = vcmask 1042434
    %v476 = vsel %vm475, %v467, %v474
    %vm477 = vcmask 1043459
    %v478 = vsel %vm477, %v468, %v476
    %vm479 = vcmask 1044484
    %v480 = vsel %vm479, %v469, %v478
    %vm481 = vcmask 1045509
    %v482 = vsel %vm481, %v470, %v480
    %vm483 = vcmask 1046534
    %v484 = vsel %vm483, %v471, %v482
    %vm485 = vcmask 1047559
    %v486 = vsel %vm485, %v472, %v484
    %vm487 = vcmask 31744
    %v488 = vsel %vm487, %v486, 0
    %vm490 = vcmask 1043456
    %v492 = vsel %vm490, %v426, 0
    %494 = vmatpush.msra.mxu0 0.0
    %495 = vmatpush.msra.mxu0 0.0
    %496 = vmatpush.msra.mxu0 0.0
    %497 = vmatpush.msra.mxu0 0.0
    %498 = vmatpush.msra.mxu0 0.0
    %499 = vmatpush.msra.mxu0 0.0
    %500 = vmatpush.msra.mxu0 0.0
    %501 = vmatpush.msra.mxu0 0.0
    %502 = vmatpush.msra.mxu0 0.0
    %503 = vmatpush.msra.mxu0 0.0
    %504 = vmatpush.msra.mxu0 0.0
    %505 = vmatpush.msra.mxu0 0.0
    %506 = vmatpush.msra.mxu0 0.0
    %507 = vmatpush.msra.mxu0 0.0
    %508 = vmatpush.msra.mxu0 0.0
    %509 = vmatpush.msra.mxu0 %v492
    %510 = vmatmul.f32.gmra.mxu0 %v488
    %v511 = vpop.f32.mrf.mxu0
    %v512 = vadd.f32 %v429, %v511
    %513 = vdwg.mxu0
    %514 = vst [vmem:[#allocation2] sm:$0xff] %v512
    // Predicated region
    $region18: #{tpu_custom_call.1} parent=1 // pred_check
      _
    $region19: #{tpu_custom_call.1} parent=1 // pred_check_branch
      %516 = sbr.rel (0) target = $region21
    $region20: #{tpu_custom_call.1} parent=1 // pred_region
      %518 = vsyncadd [#allocation3], 0
      %s520 = sshll.u32 [#allocation2], 4
      %s521 = int_to_ptr.vmem [resolvable:$true] %s520
      %s522 = sshll.u32 %s4, 4
      %s523 = int_to_ptr.hbm [resolvable:$true] %s522
      %525 = dma.vmem_to_hbm [thread:$0]  %s521, 128, %s523, [#allocation3]
    $region21: #{tpu_custom_call.1} parent=1 // pred_fallthru
      _
    // Predicated region
    $region22: #{tpu_custom_call.1} parent=1 // pred_check
      _
    $region23: #{tpu_custom_call.1} parent=1 // pred_check_branch
      %527 = sbr.rel (0) target = $region25
    $region24: #{tpu_custom_call.1} parent=1 // pred_region
      %529 = dma.done [#allocation3], 128
    $region25: #{tpu_custom_call.1} parent=1 // pred_fallthru
      _
    %530 = vsyncpa [#allocation3], 1

</llo_original>
